<compile_context>
chip_gen: v7x
topology: tpu7x:2x2x1
jax: 0.10.0
libtpu: 0.0.40
codegen_flags: <defaults>
</compile_context>

<pallas_src>
import functools
import math

import jax
import jax.numpy as jnp
from jax import lax
from jax.experimental import pallas as pl
from jax.experimental.pallas import tpu as pltpu


# ------------------------------ small helpers -------------------------------

def _pick_tile(dim, candidates):
    """Largest candidate tile that evenly divides `dim`, else the full dim."""
    for t in candidates:
        if dim >= t and dim % t == 0:
            return t
    return dim


def prepare_params(raw):
    """Hoist weight transposes + QKV fusion out of the forward path.

    `raw` holds PyTorch-layout weights (Dout, Din); we store (Din, Dout) once so
    no transpose (extra HBM round-trip) is emitted per forward call.
    """
    return {
        "wq_t": raw["wq_w"].T, "wq_b": raw["wq_b"],
        "wk_t": raw["wk_w"].T, "wk_b": raw["wk_b"],
        "wv_t": raw["wv_w"].T, "wv_b": raw["wv_b"],
        "fc_t": raw["fc_w"].T, "fc_b": raw["fc_b"],
        # Fused QKV projection weights (used when q is k is v, i.e. self-attention).
        "w_qkv_t": jnp.concatenate(
            [raw["wq_w"].T, raw["wk_w"].T, raw["wv_w"].T], axis=1),
        "b_qkv": jnp.concatenate([raw["wq_b"], raw["wk_b"], raw["wv_b"]]),
    }


# --------------------------- tiled linear (x @ W + b) ------------------------

def _linear_kernel(x_ref, w_ref, b_ref, o_ref, acc_ref):
    # grid = (M tiles, N tiles, K tiles); K is the reduction axis ("arbitrary").
    @pl.when(pl.program_id(2) == 0)
    def _():
        acc_ref[...] = jnp.zeros_like(acc_ref)

    acc_ref[...] += jnp.dot(x_ref[...], w_ref[...],
                            preferred_element_type=jnp.float32)

    @pl.when(pl.program_id(2) == pl.num_programs(2) - 1)
    def _():
        o_ref[...] = (acc_ref[...] + b_ref[...]).astype(o_ref.dtype)


def _pallas_linear(x, w_t, b, out_dtype=None):
    """y = x @ w_t + b with w_t already (Din, Dout). Tiled + pipelined."""
    m, k = x.shape
    k2, n = w_t.shape
    assert k == k2
    out_dtype = out_dtype or x.dtype

    # Modest tiles keep VMEM well under v7x's 64 MiB (and v5e's 16 MiB scoped
    # default) while staying MXU-friendly (multiples of 128).
    tm = _pick_tile(m, (256, 128))
    tn = _pick_tile(n, (256, 128))
    tk = _pick_tile(k, (512, 256, 128))

    b2 = b.reshape(1, n).astype(jnp.float32)

    return pl.pallas_call(
        _linear_kernel,
        out_shape=jax.ShapeDtypeStruct((m, n), out_dtype),
        grid=(m // tm, n // tn, k // tk),
        in_specs=[
            pl.BlockSpec((tm, tk), lambda i, j, kk: (i, kk)),
            pl.BlockSpec((tk, tn), lambda i, j, kk: (kk, j)),
            pl.BlockSpec((1, tn), lambda i, j, kk: (0, j)),
        ],
        out_specs=pl.BlockSpec((tm, tn), lambda i, j, kk: (i, j)),
        scratch_shapes=[pltpu.VMEM((tm, tn), jnp.float32)],
        compiler_params=pltpu.CompilerParams(
            dimension_semantics=("parallel", "parallel", "arbitrary")),
    )(x, w_t, b2)


# ------------------------------ attention kernel -----------------------------

def _mha_body(q_ref, k_ref, v_ref, mask, o_ref, *, num_heads, depth, scale):
    # q_ref: (tq, D), k_ref/v_ref: (S_kv, D), o_ref: (tq, D).  Heads are sliced
    # out of the lane-dense D axis inside the kernel (static unrolled loop).
    outs = []
    for h in range(num_heads):
        lo = h * depth
        qh = q_ref[:, lo:lo + depth]
        kh = k_ref[:, lo:lo + depth]
        vh = v_ref[:, lo:lo + depth]

        # QK^T: contract last dims directly -> no explicit K transpose / relayout.
        s = lax.dot_general(qh, kh, (((1,), (1,)), ((), ())),
                            preferred_element_type=jnp.float32) * scale
        if mask is not None:
            # Matches torch masked_fill(mask == 0, -inf).  Note: a fully-masked
            # row yields NaN (0/0), same as the PyTorch reference.
            s = jnp.where(mask, s, -jnp.inf)

        # Softmax in f32.  Reciprocal on the EUP (approx) + one Newton step
        # instead of a VALU divide.
        m = jnp.max(s, axis=-1, keepdims=True)
        e = jnp.exp(s - m)
        denom = jnp.sum(e, axis=-1, keepdims=True)
        inv = pl.reciprocal(denom, approx=True)
        inv = inv * (2.0 - denom * inv)
        p = (e * inv).astype(vh.dtype)

        outs.append(jnp.dot(p, vh, preferred_element_type=jnp.float32))

    # Single lane-dense (tq, D) store.
    o_ref[...] = jnp.concatenate(outs, axis=-1).astype(o_ref.dtype)


def _mha_kernel(q_ref, k_ref, v_ref, o_ref, *, num_heads, depth, scale):
    _mha_body(q_ref, k_ref, v_ref, None, o_ref,
              num_heads=num_heads, depth=depth, scale=scale)


def _mha_masked_kernel(q_ref, k_ref, v_ref, m_ref, o_ref, *, num_heads, depth, scale):
    mask = m_ref[...] != 0          # (tq, S_kv) int8 -> bool, shared by all heads
    _mha_body(q_ref, k_ref, v_ref, mask, o_ref,
              num_heads=num_heads, depth=depth, scale=scale)


def _normalize_mask(mask, sq, skv):
    """Normalize a torch-style broadcastable mask to (B_mask, Sq, Skv) int8."""
    m = jnp.asarray(mask)
    if m.ndim == 2:
        m = m[None]
    elif m.ndim == 4:
        # TODO(synk): per-head masks (B, H, Sq, Skv) with H > 1 not supported by
        # the batch-broadcast index_map path.
        assert m.shape[1] == 1, "per-head masks not supported"
        m = m[:, 0]
    assert m.ndim == 3
    bcast_batch = (m.shape[0] == 1)
    m = jnp.broadcast_to(m, (m.shape[0], sq, skv))
    return (m != 0).astype(jnp.int8), bcast_batch


def _attention(qh, kh, vh, mask, num_heads, out_dtype):
    b, sq, d = qh.shape
    skv = kh.shape[1]
    depth = d // num_heads
    scale = 1.0 / math.sqrt(depth)

    tq = _pick_tile(sq, (512, 256, 128))
    grid = (b, sq // tq)

    q_spec = pl.BlockSpec((None, tq, d), lambda bi, qi: (bi, qi, 0))
    kv_spec = pl.BlockSpec((None, skv, d), lambda bi, qi: (bi, 0, 0))
    out_spec = pl.BlockSpec((None, tq, d), lambda bi, qi: (bi, qi, 0))

    if mask is None:
        kernel = functools.partial(_mha_kernel, num_heads=num_heads,
                                   depth=depth, scale=scale)
        in_specs = [q_spec, kv_spec, kv_spec]
        args = (qh, kh, vh)
    else:
        mask_i8, bcast_batch = _normalize_mask(mask, sq, skv)
        if bcast_batch:
            m_spec = pl.BlockSpec((None, tq, skv), lambda bi, qi: (0, qi, 0))
        else:
            m_spec = pl.BlockSpec((None, tq, skv), lambda bi, qi: (bi, qi, 0))
        kernel = functools.partial(_mha_masked_kernel, num_heads=num_heads,
                                   depth=depth, scale=scale)
        in_specs = [q_spec, kv_spec, kv_spec, m_spec]
        args = (qh, kh, vh, mask_i8)

    return pl.pallas_call(
        kernel,
        out_shape=jax.ShapeDtypeStruct((b, sq, d), out_dtype),
        grid=grid,
        in_specs=in_specs,
        out_specs=out_spec,
        compiler_params=pltpu.CompilerParams(
            dimension_semantics=("parallel", "parallel")),
    )(*args)


# --------------------------------- forward -----------------------------------

def multi_head_attention(params, q, k, v, mask=None, *, num_heads,
                         compute_dtype=jnp.float32):
    """Forward pass matching the PyTorch MultiHeadAttention module.

    `params` must come from prepare_params().  `compute_dtype=jnp.bfloat16`
    selects the bf16 MXU fast path (f32 accumulation / softmax) for v5e/v6e.
    """
    b, sq, d = q.shape
    assert d % num_heads == 0
    out_dtype = q.dtype

    if (q is k) and (k is v):
        # Self-attention: one fused (D, 3D) projection -> x read from HBM once.
        x = q.reshape(b * sq, d).astype(compute_dtype)
        qkv = _pallas_linear(x, params["w_qkv_t"].astype(compute_dtype),
                             params["b_qkv"], out_dtype=compute_dtype)
        qp, kp, vp = qkv[:, :d], qkv[:, d:2 * d], qkv[:, 2 * d:]
        skv = sq
    else:
        skv = k.shape[1]
        qp = _pallas_linear(q.reshape(b * sq, d).astype(compute_dtype),
                            params["wq_t"].astype(compute_dtype),
                            params["wq_b"], out_dtype=compute_dtype)
        kp = _pallas_linear(k.reshape(b * skv, d).astype(compute_dtype),
                            params["wk_t"].astype(compute_dtype),
                            params["wk_b"], out_dtype=compute_dtype)
        vp = _pallas_linear(v.reshape(b * skv, d).astype(compute_dtype),
                            params["wv_t"].astype(compute_dtype),
                            params["wv_b"], out_dtype=compute_dtype)

    # Stay in (B, S, D): no (B,H,S,depth) transposes in the wrapper.
    attn = _attention(qp.reshape(b, sq, d), kp.reshape(b, skv, d),
                      vp.reshape(b, skv, d), mask, num_heads, compute_dtype)

    out = _pallas_linear(attn.reshape(b * sq, d).astype(compute_dtype),
                         params["fc_t"].astype(compute_dtype),
                         params["fc_b"], out_dtype=out_dtype)
    return out.reshape(b, sq, d)


# --------------------------- reference (pure JAX) ----------------------------

def _reference(raw, q, k, v, mask, num_heads):
    b, sq, d = q.shape
    h = num_heads
    depth = d // h

    def lin(x, w, bb):
        return x @ w.T + bb

    qh = lin(q, raw["wq_w"], raw["wq_b"]).reshape(b, -1, h, depth).transpose(0, 2, 1, 3)
    kh = lin(k, raw["wk_w"], raw["wk_b"]).reshape(b, -1, h, depth).transpose(0, 2, 1, 3)
    vh = lin(v, raw["wv_w"], raw["wv_b"]).reshape(b, -1, h, depth).transpose(0, 2, 1, 3)
    scores = jnp.einsum("bhqd,bhkd->bhqk", qh, kh) / math.sqrt(depth)
    if mask is not None:
        scores = jnp.where(mask == 0, -jnp.inf, scores)
    attn = jax.nn.softmax(scores, axis=-1)
    out = jnp.einsum("bhqk,bhkd->bhqd", attn, vh)
    out = out.transpose(0, 2, 1, 3).reshape(b, -1, d)
    return lin(out, raw["fc_w"], raw["fc_b"])


# ---------------------------------- main -------------------------------------

if __name__ == "__main__":
    B, S, D_MODEL, NUM_HEADS = 2, 8, 32, 4

    key = jax.random.PRNGKey(0)
    keys = jax.random.split(key, 12)
    bound = 1.0 / math.sqrt(D_MODEL)

    def uw(kk):
        return jax.random.uniform(kk, (D_MODEL, D_MODEL), jnp.float32, -bound, bound)

    def ub(kk):
        return jax.random.uniform(kk, (D_MODEL,), jnp.float32, -bound, bound)

    raw_params = {   # PyTorch nn.Linear layout: weight (Dout, Din), bias (Dout,)
        "wq_w": uw(keys[0]), "wq_b": ub(keys[1]),
        "wk_w": uw(keys[2]), "wk_b": ub(keys[3]),
        "wv_w": uw(keys[4]), "wv_b": ub(keys[5]),
        "fc_w": uw(keys[6]), "fc_b": ub(keys[7]),
    }
    params = prepare_params(raw_params)

    q = jax.random.normal(keys[8], (B, S, D_MODEL), jnp.float32)
    k = jax.random.normal(keys[9], (B, S, D_MODEL), jnp.float32)
    v = jax.random.normal(keys[10], (B, S, D_MODEL), jnp.float32)

    # 1) Self-attention (fused QKV projection path), no mask, f32.
    out1 = jax.block_until_ready(
        multi_head_attention(params, q, q, q, mask=None, num_heads=NUM_HEADS))
    ref1 = _reference(raw_params, q, q, q, None, NUM_HEADS)
    assert out1.shape == (B, S, D_MODEL)
    assert jnp.allclose(out1, ref1, atol=1e-4, rtol=1e-4), "self-attn mismatch"

    # 2) Cross-attention (separate projections) with a causal mask, f32.
    causal = jnp.tril(jnp.ones((S, S), jnp.int32))
    out2 = jax.block_until_ready(
        multi_head_attention(params, q, k, v, mask=causal, num_heads=NUM_HEADS))
    ref2 = _reference(raw_params, q, k, v, causal, NUM_HEADS)
    assert jnp.allclose(out2, ref2, atol=1e-4, rtol=1e-4), "masked attn mismatch"

    # 3) bf16 MXU fast path (v5e/v6e feedback): loose tolerance vs f32 reference.
    out3 = jax.block_until_ready(
        multi_head_attention(params, q, q, q, mask=None, num_heads=NUM_HEADS,
                             compute_dtype=jnp.bfloat16))
    assert out3.dtype == jnp.float32
    assert jnp.allclose(out3, ref1, atol=1e-1, rtol=1e-1), "bf16 path mismatch"

    print("KERNEL_OK")
</pallas_src>

<mosaic_0001>
module attributes {stable_mosaic.version = 11 : i64} {
  func.func @_linear_kernel(%arg0: i32, %arg1: i32, %arg2: i32, %arg3: memref<16x32xf32, #tpu.memory_space<vmem>>, %arg4: memref<32x96xf32, #tpu.memory_space<vmem>>, %arg5: memref<1x96xf32, #tpu.memory_space<vmem>>, %arg6: memref<16x96xf32, #tpu.memory_space<vmem>>, %arg7: memref<16x96xf32, #tpu.memory_space<vmem>>) attributes {dimension_semantics = [#tpu.dimension_semantics<parallel>, #tpu.dimension_semantics<parallel>, #tpu.dimension_semantics<arbitrary>], iteration_bounds = array<i64: 1, 1, 1>, scalar_prefetch = 0 : i64, scratch_operands = 1 : i64, tpu.core_type = #tpu.core_type<tc>, window_params = [{transform_indices = @transform_0, window_bounds = array<i64: 16, 32>}, {transform_indices = @transform_1, window_bounds = array<i64: 32, 96>}, {transform_indices = @transform_2, window_bounds = array<i64: 1, 96>}, {transform_indices = @transform_3, window_bounds = array<i64: 16, 96>}]} {
    %c0_i32 = arith.constant 0 : i32
    %0 = arith.cmpi eq, %arg2, %c0_i32 : i32
    %1 = arith.extui %0 : i1 to i32
    %c0_i32_0 = arith.constant 0 : i32
    %2 = arith.cmpi ne, %1, %c0_i32_0 : i32
    scf.if %2 {
      %cst_10 = arith.constant 0.000000e+00 : f32
      %12 = vector.broadcast %cst_10 : f32 to vector<16x96xf32>
      %c0_11 = arith.constant 0 : index
      %c0_12 = arith.constant 0 : index
      %13 = vector.load %arg7[%c0_11, %c0_12] : memref<16x96xf32, #tpu.memory_space<vmem>>, vector<16x96xf32>
      tpu.vector_store %arg7[%c0_11, %c0_12], %12 {strides = array<i32>} : memref<16x96xf32, #tpu.memory_space<vmem>>, vector<16x96xf32>,
    } else {
    }
    %c0 = arith.constant 0 : index
    %c0_1 = arith.constant 0 : index
    %3 = vector.load %arg7[%c0, %c0_1] : memref<16x96xf32, #tpu.memory_space<vmem>>, vector<16x96xf32>
    %c0_2 = arith.constant 0 : index
    %c0_3 = arith.constant 0 : index
    %4 = vector.load %arg3[%c0_2, %c0_3] : memref<16x32xf32, #tpu.memory_space<vmem>>, vector<16x32xf32>
    %c0_4 = arith.constant 0 : index
    %c0_5 = arith.constant 0 : index
    %5 = vector.load %arg4[%c0_4, %c0_5] : memref<32x96xf32, #tpu.memory_space<vmem>>, vector<32x96xf32>
    %cst = arith.constant dense<0.000000e+00> : vector<16x96xf32>
    %6 = tpu.matmul %4, %5, %cst {dimension_numbers = #tpu.dot_dimension_numbers<[1], [0], [0], [1], [0, 0, 1, 1], [], []>} : vector<16x32xf32>, vector<32x96xf32>, vector<16x96xf32> -> vector<16x96xf32>
    %7 = arith.addf %3, %6 : vector<16x96xf32>
    %c0_6 = arith.constant 0 : index
    %c0_7 = arith.constant 0 : index
    %8 = vector.load %arg7[%c0_6, %c0_7] : memref<16x96xf32, #tpu.memory_space<vmem>>, vector<16x96xf32>
    tpu.vector_store %arg7[%c0_6, %c0_7], %7 {strides = array<i32>} : memref<16x96xf32, #tpu.memory_space<vmem>>, vector<16x96xf32>,
    %c0_i32_8 = arith.constant 0 : i32
    %9 = arith.cmpi eq, %arg2, %c0_i32_8 : i32
    %10 = arith.extui %9 : i1 to i32
    %c0_i32_9 = arith.constant 0 : i32
    %11 = arith.cmpi ne, %10, %c0_i32_9 : i32
    scf.if %11 {
      %c0_10 = arith.constant 0 : index
      %c0_11 = arith.constant 0 : index
      %12 = vector.load %arg7[%c0_10, %c0_11] : memref<16x96xf32, #tpu.memory_space<vmem>>, vector<16x96xf32>
      %c0_12 = arith.constant 0 : index
      %c0_13 = arith.constant 0 : index
      %13 = vector.load %arg5[%c0_12, %c0_13] : memref<1x96xf32, #tpu.memory_space<vmem>>, vector<1x96xf32>
      %14 = vector.broadcast %13 : vector<1x96xf32> to vector<16x96xf32>
      %15 = arith.addf %12, %14 : vector<16x96xf32>
      %c0_14 = arith.constant 0 : index
      %c0_15 = arith.constant 0 : index
      %16 = vector.load %arg6[%c0_14, %c0_15] : memref<16x96xf32, #tpu.memory_space<vmem>>, vector<16x96xf32>
      tpu.vector_store %arg6[%c0_14, %c0_15], %15 {strides = array<i32>} : memref<16x96xf32, #tpu.memory_space<vmem>>, vector<16x96xf32>,
    } else {
    }
    return
  }
  func.func @transform_0(%arg0: i32, %arg1: i32, %arg2: i32) -> (i32, i32) {
    %c0_i32 = arith.constant 0 : i32
    return %arg0, %arg2 : i32, i32
  }
  func.func @transform_1(%arg0: i32, %arg1: i32, %arg2: i32) -> (i32, i32) {
    %c0_i32 = arith.constant 0 : i32
    return %arg2, %arg1 : i32, i32
  }
  func.func @transform_2(%arg0: i32, %arg1: i32, %arg2: i32) -> (i32, i32) {
    %c0_i32 = arith.constant 0 : i32
    %c0_i32_0 = arith.constant 0 : i32
    return %c0_i32, %arg1 : i32, i32
  }
  func.func @transform_3(%arg0: i32, %arg1: i32, %arg2: i32) -> (i32, i32) {
    %c0_i32 = arith.constant 0 : i32
    return %arg0, %arg1 : i32, i32
  }
}

</mosaic_0001>

<llo_original>
// kernel: tpu_custom_call.1
$region0: #{tpu_custom_call.1}
  #allocation0 [shape = 'u32[]', space=smem, size = 0x4, offset = 0x4, fixed_abs, tag = 'smem constant byte address 0x4 - core index']
  #allocation1 [shape = 'u32[144,128]{1,0:T(1,128)}', space=vmem, size = 0x12000, scoped, tag = 'internal scratch']
  #allocation2 [shape = 'f32[16,96]{1,0:T(8,128)}', space=vmem, size = 0x2000, scoped, tag = 'scratch operand']
  %s0 = inlined_call_operand.hbm [shape: f32[16,32], index: 0, kind: input, shape index: {}]
  %s1 = inlined_call_operand.hbm [shape: f32[32,96], index: 1, kind: input, shape index: {}]
  %s2 = inlined_call_operand.vmem [shape: f32[1,96], index: 2, kind: input, shape index: {}]
  %s3 = inlined_call_operand.hbm [shape: f32[16,96], index: 3, kind: output, shape index: {}]
  %s4 = sld [smem:[#allocation0]]
  $region38: #{tpu_custom_call.1} parent=0
    _
  %s6 = ssub.s32 1, %s4
  %s7 = scalar_select 0, %s6, %s4
  $region1: #{tpu_custom_call.1} parent=0
    #allocation3 [shape = 'u8[8192]{0}', space=vmem, size = 0x2000, scoped, tag = 'input window, operand 0, single buffered']
    #allocation4 [shape = 's32[1]{0}', space=sflag, size = 0x4, scoped, tag = 'scoped memory for tpu_custom_call.1']
    #allocation5 [shape = 's32[1]{0}', space=sflag, size = 0x4, scoped, tag = 'scoped memory for tpu_custom_call.1']
    #allocation6 [shape = 'u8[16384]{0}', space=vmem, size = 0x4000, scoped, tag = 'input window, operand 1, single buffered']
    #allocation7 [shape = 's32[1]{0}', space=sflag, size = 0x4, scoped, tag = 'scoped memory for tpu_custom_call.1']
    #allocation8 [shape = 'u8[8192]{0}', space=vmem, size = 0x2000, scoped, tag = 'output window, operand 0, single buffered']
    %8 = vsyncpa [#allocation4], 0
    %9 = vsyncpa [#allocation7], 0
    %10 = vsyncpa [#allocation5], 0
    // Predicated region
    $region2: #{tpu_custom_call.1} parent=1 // pred_check
      _
    $region3: #{tpu_custom_call.1} parent=1 // pred_check_branch
      %12 = sbr.rel (0) target = $region5
    $region4: #{tpu_custom_call.1} parent=1 // pred_region
      %s14 = ssub.s32 256, 256
      %15 = vsyncadd [#allocation4], %s14
      %s16 = sshll.u32 [#allocation3], 4
      %s17 = int_to_ptr.vmem [resolvable:$true] %s16
      %22 = dma.hbm_to_vmem [thread:$0]  %s0, 256, %s17, [#allocation4], 128, 128, 8
    $region5: #{tpu_custom_call.1} parent=1 // pred_fallthru
      _
    // Predicated region
    $region6: #{tpu_custom_call.1} parent=1 // pred_check
      _
    $region7: #{tpu_custom_call.1} parent=1 // pred_check_branch
      %24 = sbr.rel (0) target = $region9
    $region8: #{tpu_custom_call.1} parent=1 // pred_region
      %s26 = ssub.s32 512, 512
      %27 = vsyncadd [#allocation7], %s26
      %s28 = sshll.u32 [#allocation6], 4
      %s29 = int_to_ptr.vmem [resolvable:$true] %s28
      %34 = dma.hbm_to_vmem [thread:$0]  %s1, 512, %s29, [#allocation7], 128, 128, 8
    $region9: #{tpu_custom_call.1} parent=1 // pred_fallthru
      _
    // Predicated region
    $region10: #{tpu_custom_call.1} parent=1 // pred_check
      _
    $region11: #{tpu_custom_call.1} parent=1 // pred_check_branch
      %36 = sbr.rel (0) target = $region13
    $region12: #{tpu_custom_call.1} parent=1 // pred_region
      _
    $region13: #{tpu_custom_call.1} parent=1 // pred_fallthru
      _
    // Predicated region
    $region14: #{tpu_custom_call.1} parent=1 // pred_check
      _
    $region15: #{tpu_custom_call.1} parent=1 // pred_check_branch
      %38 = sbr.rel (0) target = $region17
    $region16: #{tpu_custom_call.1} parent=1 // pred_region
      %39 = dma.done [#allocation4], 256
    $region17: #{tpu_custom_call.1} parent=1 // pred_fallthru
      _
    // Predicated region
    $region18: #{tpu_custom_call.1} parent=1 // pred_check
      _
    $region19: #{tpu_custom_call.1} parent=1 // pred_check_branch
      %41 = sbr.rel (0) target = $region21
    $region20: #{tpu_custom_call.1} parent=1 // pred_region
      %42 = dma.done [#allocation7], 512
    $region21: #{tpu_custom_call.1} parent=1 // pred_fallthru
      _
    %p43 = scmp.eq.s32.totalorder 0, 0
    // Predicated region
    $region22: #{tpu_custom_call.1} parent=1 // pred_check
      %p44 = pneg %p43
    $region23: #{tpu_custom_call.1} parent=1 // pred_check_branch
      %46 = sbr.rel (%p44) target = $region25
    $region24: #{tpu_custom_call.1} parent=1 // pred_region
      %vm47 = vcmask 785408
      %48 = vst.msk [vmem:[#allocation2] sm:$0xff] %vm47, 0.0
      %49 = vst.msk [vmem:[#allocation2 + $0x8] sm:$0xff] %vm47, 0.0
    $region25: #{tpu_custom_call.1} parent=1 // pred_fallthru
      _
    %v50 = vld [vmem:[#allocation2] sm:$0xff]
    %v51 = vld [vmem:[#allocation2 + $0x8] sm:$0xff]
    %v52 = vld [vmem:[#allocation3] sm:$0xff]
    %v53 = vld [vmem:[#allocation3 + $0x8] sm:$0xff]
    %v54 = vld [vmem:[#allocation6] sm:$0xff]
    %v55 = vld [vmem:[#allocation6 + $0x8] sm:$0xff]
    %v56 = vld [vmem:[#allocation6 + $0x10] sm:$0xff]
    %v57 = vld [vmem:[#allocation6 + $0x18] sm:$0xff]
    %vm58 = vcmask 261120
    %v60 = vsel %vm58, %v52, 0
    %v63 = vsel %vm58, %v53, 0
    %65 = vmatprep.subr.mxu0 0.0
    %66 = vmatpush1.msra.mxu0 %v54
    %67 = vmatprep.subr.mxu0 0.0
    %68 = vmatpush1.msra.mxu0 %v55
    %69 = vmatprep.subr.mxu0 0.0
    %70 = vmatpush1.msra.mxu0 %v56
    %71 = vmatprep.subr.mxu0 0.0
    %72 = vmatpush1.msra.mxu0 %v57
    %73 = vmatprep.subr.mxu0 0.0
    %74 = vmatpush1.msra.mxu0 0.0
    %75 = vmatprep.subr.mxu0 0.0
    %76 = vmatpush1.msra.mxu0 0.0
    %77 = vmatprep.subr.mxu0 0.0
    %78 = vmatpush1.msra.mxu0 0.0
    %79 = vmatprep.subr.mxu0 0.0
    %80 = vmatpush1.msra.mxu0 0.0
    %81 = vmatprep.subr.mxu0 0.0
    %82 = vmatpush1.msra.mxu0 0.0
    %83 = vmatprep.subr.mxu0 0.0
    %84 = vmatpush1.msra.mxu0 0.0
    %85 = vmatprep.subr.mxu0 0.0
    %86 = vmatpush1.msra.mxu0 0.0
    %87 = vmatprep.subr.mxu0 0.0
    %88 = vmatpush1.msra.mxu0 0.0
    %89 = vmatprep.subr.mxu0 0.0
    %90 = vmatpush1.msra.mxu0 0.0
    %91 = vmatprep.subr.mxu0 0.0
    %92 = vmatpush1.msra.mxu0 0.0
    %93 = vmatprep.subr.mxu0 0.0
    %94 = vmatpush1.msra.mxu0 0.0
    %95 = vmatprep.subr.mxu0 0.0
    %96 = vmatpush1.msra.mxu0 0.0
    %97 = vmatprep.subr.mxu0 0.0
    %98 = vmatpush1.msra.mxu0 0.0
    %99 = vmatprep.subr.mxu0 0.0
    %100 = vmatpush1.msra.mxu0 0.0
    %101 = vmatprep.subr.mxu0 0.0
    %102 = vmatpush1.msra.mxu0 0.0
    %103 = vmatprep.subr.mxu0 0.0
    %104 = vmatpush1.msra.mxu0 0.0
    %105 = vmatprep.subr.mxu0 0.0
    %106 = vmatpush1.msra.mxu0 0.0
    %107 = vmatprep.subr.mxu0 0.0
    %108 = vmatpush1.msra.mxu0 0.0
    %109 = vmatprep.subr.mxu0 0.0
    %110 = vmatpush1.msra.mxu0 0.0
    %111 = vmatprep.subr.mxu0 0.0
    %112 = vmatpush1.msra.mxu0 0.0
    %113 = vmatprep.subr.mxu0 0.0
    %114 = vmatpush1.msra.mxu0 0.0
    %115 = vmatprep.subr.mxu0 0.0
    %116 = vmatpush1.msra.mxu0 0.0
    %117 = vmatprep.subr.mxu0 0.0
    %118 = vmatpush1.msra.mxu0 0.0
    %119 = vmatprep.subr.mxu0 0.0
    %120 = vmatpush1.msra.mxu0 0.0
    %121 = vmatprep.subr.mxu0 0.0
    %122 = vmatpush1.msra.mxu0 0.0
    %123 = vmatprep.subr.mxu0 0.0
    %124 = vmatpush1.msra.mxu0 0.0
    %125 = vmatprep.subr.mxu0 0.0
    %126 = vmatpush1.msra.mxu0 0.0
    %127 = vmatprep.subr.mxu0 0.0
    %128 = vmatpush1.msra.mxu0 0.0
    %129 = vmatprep.mubr.f32.mxu0 0.0
    %130 = vmatmul.mubr.f32.gmra.mrb[0].mxu0 %v60
    %v131 = vpop.f32.mrb[0].mxu0
    %v132 = vadd.f32 0.0, %v131
    %v133 = vpop.f32.mrb[0].mxu0
    %134 = vmatprep.mubr.f32.mxu0 0.0
    %135 = vmatmul.mubr.f32.gmra.mrb[0].mxu0 %v63
    %v136 = vpop.f32.mrb[0].mxu0
    %v137 = vadd.f32 0.0, %v136
    %v138 = vpop.f32.mrb[0].mxu0
    %139 = vdwg.mxu0
    %v140 = vadd.f32 %v50, %v132
    %v141 = vadd.f32 %v51, %v137
    %vm142 = vcmask 785408
    %143 = vst.msk [vmem:[#allocation2] sm:$0xff] %vm142, %v140
    %144 = vst.msk [vmem:[#allocation2 + $0x8] sm:$0xff] %vm142, %v141
    // Predicated region
    $region26: #{tpu_custom_call.1} parent=1 // pred_check
      %p145 = pneg %p43
    $region27: #{tpu_custom_call.1} parent=1 // pred_check_branch
      %147 = sbr.rel (%p145) target = $region29
    $region28: #{tpu_custom_call.1} parent=1 // pred_region
      %v148 = vld [vmem:[#allocation2] sm:$0xff]
      %v149 = vld [vmem:[#allocation2 + $0x8] sm:$0xff]
      %v150 = vld [vmem:[%s2] sm:$0x1]
      %v152 = vlaneseq
      %v153 = vshrl.u32 %v152, 7
      %v154 = vsub.s32 0, %v153
      %v155 = vrot.slane %v150, %v154
      %v157 = vadd.f32 %v148, %v155
      %v158 = vadd.f32 %v149, %v155
      %159 = vst.msk [vmem:[#allocation8] sm:$0xff] %vm142, %v157
      %160 = vst.msk [vmem:[#allocation8 + $0x8] sm:$0xff] %vm142, %v158
    $region29: #{tpu_custom_call.1} parent=1 // pred_fallthru
      _
    // Predicated region
    $region30: #{tpu_custom_call.1} parent=1 // pred_check
      _
    $region31: #{tpu_custom_call.1} parent=1 // pred_check_branch
      %162 = sbr.rel (0) target = $region33
    $region32: #{tpu_custom_call.1} parent=1 // pred_region
      %s164 = ssub.s32 256, 256
      %165 = vsyncadd [#allocation5], %s164
      %s166 = sshll.u32 [#allocation8], 4
      %s167 = int_to_ptr.vmem [resolvable:$true] %s166
      %172 = dma.vmem_to_hbm [thread:$0]  %s167, 256, %s3, [#allocation5], 128, 128, 8
    $region33: #{tpu_custom_call.1} parent=1 // pred_fallthru
      _
    // Predicated region
    $region34: #{tpu_custom_call.1} parent=1 // pred_check
      _
    $region35: #{tpu_custom_call.1} parent=1 // pred_check_branch
      %174 = sbr.rel (0) target = $region37
    $region36: #{tpu_custom_call.1} parent=1 // pred_region
      %175 = dma.done [#allocation5], 256
    $region37: #{tpu_custom_call.1} parent=1 // pred_fallthru
      _
    %176 = vsyncpa [#allocation4], 1
    %177 = vsyncpa [#allocation7], 1
    %178 = vsyncpa [#allocation5], 1

</llo_original>
